<compile_context>
chip_gen: v7x
topology: tpu7x:2x2x1
jax: 0.10.0
libtpu: 0.0.40
codegen_flags: <defaults>
</compile_context>

<pallas_src>
import functools

import jax
import jax.numpy as jnp
from jax.experimental import pallas as pl
from jax.experimental.pallas import tpu as pltpu

_MIB = 1024 * 1024
_WS_VMEM_BUDGET = 24 * _MIB      # resident-weight budget (safe for v7x's 64 MiB VMEM / TC)
_PALLAS_MIN_BYTES = 256 * 1024   # below this, XLA's fused dot wins on dispatch overhead


def _round_up(x, m):
    return ((x + m - 1) // m) * m


# ---------------------------------------------------------------------------
# Kernels
# ---------------------------------------------------------------------------

def _linear_simple_kernel(a_ref, w_ref, b_ref, o_ref, *, compute_dtype):
    """Single-K-block linear tile: o = a @ w + b (f32 accumulate, one downcast)."""
    a = a_ref[...]
    if compute_dtype is not None:
        a = a.astype(compute_dtype)      # in-kernel cast rides a free VPU slot under the MXU
    acc = jnp.dot(a, w_ref[...], preferred_element_type=jnp.float32)
    o_ref[...] = (acc + b_ref[...]).astype(o_ref.dtype)


def _linear_acc_kernel(a_ref, w_ref, b_ref, o_ref, acc_ref, *, compute_dtype):
    """General tiled linear with K-axis reduction into an f32 VMEM accumulator."""
    @pl.when(pl.program_id(2) == 0)
    def _():
        # Fold the bias into the accumulator init (drops the epilogue add).
        acc_ref[...] = jnp.broadcast_to(b_ref[...].astype(jnp.float32), acc_ref.shape)

    a = a_ref[...]
    if compute_dtype is not None:
        a = a.astype(compute_dtype)
    acc_ref[...] += jnp.dot(a, w_ref[...], preferred_element_type=jnp.float32)

    @pl.when(pl.program_id(2) == pl.num_programs(2) - 1)
    def _():
        o_ref[...] = acc_ref[...].astype(o_ref.dtype)


# ---------------------------------------------------------------------------
# Wrappers
# ---------------------------------------------------------------------------

def prepare_outputnet_params(W, b, compute_dtype=None):
    """One-time parameter prep: MXU-natural [K, N] weight and f32 (1, N) bias.

    Do this once at parameter creation / update time (not per forward call) to avoid a
    per-call transpose pass over the weight.
    """
    Wt = jnp.asarray(W).T                                   # (K, N)
    if compute_dtype is not None:
        Wt = Wt.astype(compute_dtype)
    b2 = jnp.asarray(b).reshape(1, -1).astype(jnp.float32)  # (1, N)
    return Wt, b2


def _ws_footprint(tm, K, N, a_esz, w_esz, o_esz):
    # double-buffered inputs (A tile, resident W^T, bias) + double-buffered output tile
    return 2 * (tm * K * a_esz + K * N * w_esz + N * 4) + 2 * (tm * N * o_esz)


def _linear_ws(A, Wt, b2, tm, compute_dtype):
    """Weights-stationary schedule: grid over M only, W^T and bias resident in VMEM."""
    M, K = A.shape
    N = Wt.shape[1]
    fp = _ws_footprint(tm, K, N,
                       jnp.dtype(A.dtype).itemsize,
                       jnp.dtype(Wt.dtype).itemsize,
                       jnp.dtype(A.dtype).itemsize)
    kernel = functools.partial(_linear_simple_kernel, compute_dtype=compute_dtype)
    return pl.pallas_call(
        kernel,
        out_shape=jax.ShapeDtypeStruct((M, N), A.dtype),
        grid=(pl.cdiv(M, tm),),
        in_specs=[
            pl.BlockSpec((tm, K), lambda i: (i, 0)),   # A streams over batch
            pl.BlockSpec((K, N), lambda i: (0, 0)),    # W^T: constant block index -> DMA'd once
            pl.BlockSpec((1, N), lambda i: (0, 0)),    # bias: resident
        ],
        out_specs=pl.BlockSpec((tm, N), lambda i: (i, 0)),
        compiler_params=pltpu.CompilerParams(
            dimension_semantics=("parallel",),
            vmem_limit_bytes=min(fp + 8 * _MIB, 48 * _MIB),
        ),
    )(A, Wt, b2)


def _linear_tiled(A, Wt, b2, compute_dtype, tm_cap, tn_cap, tk_cap, sub):
    """General fallback: 3D (M, N, K) grid with an f32 accumulator resident across K."""
    M, K = A.shape
    N = Wt.shape[1]
    out_dtype = A.dtype

    tm = min(tm_cap, _round_up(M, sub))
    tn = min(tn_cap, _round_up(N, 128))
    tk = min(tk_cap, _round_up(K, 128))

    # Only the reduction (K) axis needs explicit zeros; M/N partial edge blocks are masked
    # by Pallas automatically.
    Kp = _round_up(K, tk)
    if Kp != K:
        A = jnp.pad(A, ((0, 0), (0, Kp - K)))
        Wt = jnp.pad(Wt, ((0, Kp - K), (0, 0)))

    grid = (pl.cdiv(M, tm), pl.cdiv(N, tn), Kp // tk)

    a_esz = jnp.dtype(A.dtype).itemsize
    w_esz = jnp.dtype(Wt.dtype).itemsize
    fp = (2 * (tm * tk * a_esz + tk * tn * w_esz + tn * 4)
          + 2 * tm * tn * jnp.dtype(out_dtype).itemsize
          + tm * tn * 4)

    kernel = functools.partial(_linear_acc_kernel, compute_dtype=compute_dtype)
    return pl.pallas_call(
        kernel,
        out_shape=jax.ShapeDtypeStruct((M, N), out_dtype),
        grid_spec=pltpu.PrefetchScalarGridSpec(
            num_scalar_prefetch=0,
            grid=grid,
            in_specs=[
                pl.BlockSpec((tm, tk), lambda i, j, k: (i, k)),   # A tile
                pl.BlockSpec((tk, tn), lambda i, j, k: (k, j)),   # W^T tile
                pl.BlockSpec((1, tn), lambda i, j, k: (0, j)),    # bias tile
            ],
            out_specs=pl.BlockSpec((tm, tn), lambda i, j, k: (i, j)),
            scratch_shapes=[pltpu.VMEM((tm, tn), jnp.float32)],
        ),
        compiler_params=pltpu.CompilerParams(
            dimension_semantics=("parallel", "parallel", "arbitrary"),
            vmem_limit_bytes=min(fp + 8 * _MIB, 48 * _MIB),
        ),
    )(A, Wt, b2)


def outputnet_forward_prepared(A, Wt, b2, *, compute_dtype=None,
                               ws_budget_bytes=_WS_VMEM_BUDGET,
                               tm_cap=512, tn_cap=512, tk_cap=512):
    """Forward with pre-transposed weight Wt[K,N] and bias b2[1,N]."""
    M, K = A.shape
    K2, N = Wt.shape
    assert K == K2, (K, K2)

    a_esz = jnp.dtype(A.dtype).itemsize
    w_esz = jnp.dtype(Wt.dtype).itemsize
    eff = jnp.dtype(compute_dtype) if compute_dtype is not None else jnp.dtype(A.dtype)
    sub = max(8, 32 // eff.itemsize)   # 8 for f32, 16 for bf16, 32 for int8/fp8

    # --- Schedule 1: weights-stationary (whole K & N resident, grid over M only). ---
    tm = min(tm_cap, _round_up(M, sub))
    while tm > sub and _ws_footprint(tm, K, N, a_esz, w_esz, a_esz) > ws_budget_bytes:
        tm = max(sub, _round_up(tm // 2, sub))
    if _ws_footprint(tm, K, N, a_esz, w_esz, a_esz) <= ws_budget_bytes:
        return _linear_ws(A, Wt, b2, tm, compute_dtype)

    # --- Schedule 2: general 3D tiling (weights too large to keep resident). ---
    return _linear_tiled(A, Wt, b2, compute_dtype, tm_cap, tn_cap, tk_cap, sub)


def outputnet_forward(A, W, b, *, compute_dtype=None, force_pallas=False,
                      ws_budget_bytes=_WS_VMEM_BUDGET):
    """Forward pass of Outputnet: dynamic_output_layer(A) = A @ W.T + b."""
    M, K = A.shape
    N = W.shape[0]
    esz = jnp.dtype(A.dtype).itemsize
    bytes_moved = (M * K + K * N + M * N + N) * esz
    if (not force_pallas) and bytes_moved < _PALLAS_MIN_BYTES:
        # Tiny-shape fast path: dispatch overhead dominates; let XLA emit the fused dot.
        return (A @ W.T + b.reshape(1, N)).astype(A.dtype)
    Wt, b2 = prepare_outputnet_params(W, b, compute_dtype)
    return outputnet_forward_prepared(A, Wt, b2, compute_dtype=compute_dtype,
                                      ws_budget_bytes=ws_budget_bytes)


def init_outputnet_params(key, old_action_dim, new_action_dim, dtype=jnp.float32):
    """Deterministic init mimicking torch.nn.Linear default U(-1/sqrt(fan_in), 1/sqrt(fan_in))."""
    kw, kb = jax.random.split(key)
    bound = 1.0 / jnp.sqrt(jnp.asarray(old_action_dim, dtype=jnp.float32))
    W = jax.random.uniform(kw, (new_action_dim, old_action_dim), dtype, -bound, bound)
    b = jax.random.uniform(kb, (new_action_dim,), dtype, -bound, bound)
    return W, b


if __name__ == "__main__":
    key = jax.random.PRNGKey(0)
    k1, k2, k3, k4 = jax.random.split(key, 4)

    # --- Case 1: module-scale shapes (old_action_dim=8 -> new_action_dim=5), batch=4. ---
    batch, old_dim, new_dim = 4, 8, 5
    A = jax.random.normal(k1, (batch, old_dim), dtype=jnp.float32)
    W, b = init_outputnet_params(k2, old_dim, new_dim)
    ref = A @ W.T + b

    # Gated wrapper (takes the XLA fast path at this size).
    out_small = jax.block_until_ready(outputnet_forward(A, W, b))
    assert out_small.shape == (batch, new_dim)
    assert jnp.allclose(out_small, ref, atol=1e-5, rtol=1e-5)

    # Same shapes forced through the Pallas weights-stationary kernel (unpadded small dims).
    out_small_pl = jax.block_until_ready(outputnet_forward(A, W, b, force_pallas=True))
    assert out_small_pl.shape == (batch, new_dim)
    assert jnp.allclose(out_small_pl, ref, atol=1e-5, rtol=1e-5)

    # --- Case 2: larger shapes; weights-stationary schedule with a partial M edge block. ---
    batch2, old2, new2 = 600, 384, 256   # grid over M = (2,), second block partial (88 rows)
    A2 = jax.random.normal(k3, (batch2, old2), dtype=jnp.float32)
    W2, b2v = init_outputnet_params(k4, old2, new2)
    ref2 = A2 @ W2.T + b2v

    out2 = jax.block_until_ready(outputnet_forward(A2, W2, b2v))       # f32 MXU path
    assert out2.shape == (batch2, new2)
    assert jnp.allclose(out2, ref2, atol=1e-4, rtol=1e-4)

    # bf16 MXU operands (W cast once param-side, A cast in-kernel), f32 accumulation + bias.
    out2_bf16 = jax.block_until_ready(
        outputnet_forward(A2, W2, b2v, compute_dtype=jnp.bfloat16)
    )
    assert out2_bf16.shape == (batch2, new2)
    assert jnp.allclose(out2_bf16, ref2, atol=5e-2, rtol=5e-2)

    # Forced general 3D-tiled fallback (ws budget 0) to validate the K-accumulator path.
    out2_tiled = jax.block_until_ready(
        outputnet_forward(A2, W2, b2v, ws_budget_bytes=0)
    )
    assert out2_tiled.shape == (batch2, new2)
    assert jnp.allclose(out2_tiled, ref2, atol=1e-4, rtol=1e-4)

    print("KERNEL_OK")
</pallas_src>

<mosaic_0001>
module attributes {stable_mosaic.version = 11 : i64} {
  func.func @_linear_simple_kernel(%arg0: i32, %arg1: memref<8x8xf32, #tpu.memory_space<vmem>>, %arg2: memref<8x5xf32, #tpu.memory_space<vmem>>, %arg3: memref<1x5xf32, #tpu.memory_space<vmem>>, %arg4: memref<8x5xf32, #tpu.memory_space<vmem>>) attributes {dimension_semantics = [#tpu.dimension_semantics<parallel>], iteration_bounds = array<i64: 1>, scalar_prefetch = 0 : i64, scratch_operands = 0 : i64, tpu.core_type = #tpu.core_type<tc>, window_params = [{transform_indices = @transform_0, window_bounds = array<i64: 8, 8>}, {pipeline_mode = #tpu.pipeline_mode<synchronous>, transform_indices = @transform_1, window_bounds = array<i64: 8, 5>}, {pipeline_mode = #tpu.pipeline_mode<synchronous>, transform_indices = @transform_2, window_bounds = array<i64: 1, 5>}, {transform_indices = @transform_3, window_bounds = array<i64: 8, 5>}]} {
    %c0 = arith.constant 0 : index
    %c0_0 = arith.constant 0 : index
    %0 = vector.load %arg1[%c0, %c0_0] : memref<8x8xf32, #tpu.memory_space<vmem>>, vector<8x8xf32>
    %c0_1 = arith.constant 0 : index
    %c0_2 = arith.constant 0 : index
    %1 = vector.load %arg2[%c0_1, %c0_2] : memref<8x5xf32, #tpu.memory_space<vmem>>, vector<8x5xf32>
    %cst = arith.constant dense<0.000000e+00> : vector<8x5xf32>
    %2 = tpu.matmul %0, %1, %cst {dimension_numbers = #tpu.dot_dimension_numbers<[1], [0], [0], [1], [0, 0, 1, 1], [], []>} : vector<8x8xf32>, vector<8x5xf32>, vector<8x5xf32> -> vector<8x5xf32>
    %c0_3 = arith.constant 0 : index
    %c0_4 = arith.constant 0 : index
    %3 = vector.load %arg3[%c0_3, %c0_4] : memref<1x5xf32, #tpu.memory_space<vmem>>, vector<1x5xf32>
    %4 = vector.broadcast %3 : vector<1x5xf32> to vector<8x5xf32>
    %5 = arith.addf %2, %4 : vector<8x5xf32>
    %c0_5 = arith.constant 0 : index
    %c0_6 = arith.constant 0 : index
    %6 = vector.load %arg4[%c0_5, %c0_6] : memref<8x5xf32, #tpu.memory_space<vmem>>, vector<8x5xf32>
    tpu.vector_store %arg4[%c0_5, %c0_6], %5 {strides = array<i32>} : memref<8x5xf32, #tpu.memory_space<vmem>>, vector<8x5xf32>,
    return
  }
  func.func @transform_0(%arg0: i32) -> (i32, i32) {
    %c0_i32 = arith.constant 0 : i32
    %c0_i32_0 = arith.constant 0 : i32
    return %arg0, %c0_i32 : i32, i32
  }
  func.func @transform_1(%arg0: i32) -> (i32, i32) {
    %c0_i32 = arith.constant 0 : i32
    %c0_i32_0 = arith.constant 0 : i32
    %c0_i32_1 = arith.constant 0 : i32
    return %c0_i32, %c0_i32_0 : i32, i32
  }
  func.func @transform_2(%arg0: i32) -> (i32, i32) {
    %c0_i32 = arith.constant 0 : i32
    %c0_i32_0 = arith.constant 0 : i32
    %c0_i32_1 = arith.constant 0 : i32
    return %c0_i32, %c0_i32_0 : i32, i32
  }
  func.func @transform_3(%arg0: i32) -> (i32, i32) {
    %c0_i32 = arith.constant 0 : i32
    %c0_i32_0 = arith.constant 0 : i32
    return %arg0, %c0_i32 : i32, i32
  }
}

</mosaic_0001>

<llo_original>
// kernel: tpu_custom_call.1
$region0: #{tpu_custom_call.1}
  #allocation0 [shape = 'u32[]', space=smem, size = 0x4, offset = 0x4, fixed_abs, tag = 'smem constant byte address 0x4 - core index']
  #allocation1 [shape = 'u32[144,128]{1,0:T(1,128)}', space=vmem, size = 0x12000, scoped, tag = 'internal scratch']
  %s0 = inlined_call_operand.hbm [shape: f32[4,8], index: 0, kind: input, shape index: {}]
  %s1 = inlined_call_operand.hbm [shape: f32[8,5], index: 1, kind: input, shape index: {}]
  %s2 = inlined_call_operand.vmem [shape: f32[1,5], index: 2, kind: input, shape index: {}]
  %s3 = inlined_call_operand.hbm [shape: f32[4,5], index: 3, kind: output, shape index: {}]
  %s4 = sld [smem:[#allocation0]]
  $region30: #{tpu_custom_call.1} parent=0
    _
  %s6 = ssub.s32 1, %s4
  %s7 = scalar_select 0, %s6, %s4
  $region1: #{tpu_custom_call.1} parent=0
    #allocation2 [shape = 'u8[4096]{0}', space=vmem, size = 0x1000, scoped, tag = 'input window, operand 0, single buffered']
    #allocation3 [shape = 's32[1]{0}', space=sflag, size = 0x4, scoped, tag = 'scoped memory for tpu_custom_call.1']
    #allocation4 [shape = 's32[1]{0}', space=sflag, size = 0x4, scoped, tag = 'scoped memory for tpu_custom_call.1']
    #allocation5 [shape = 'u8[4096]{0}', space=vmem, size = 0x1000, scoped, tag = 'input window, operand 1, single buffered']
    #allocation6 [shape = 's32[1]{0}', space=sflag, size = 0x4, scoped, tag = 'scoped memory for tpu_custom_call.1']
    #allocation7 [shape = 'u8[4096]{0}', space=vmem, size = 0x1000, scoped, tag = 'output window, operand 0, single buffered']
    %8 = vsyncpa [#allocation3], 0
    %9 = vsyncpa [#allocation6], 0
    %10 = vsyncpa [#allocation4], 0
    // Predicated region
    $region2: #{tpu_custom_call.1} parent=1 // pred_check
      _
    $region3: #{tpu_custom_call.1} parent=1 // pred_check_branch
      %12 = sbr.rel (0) target = $region5
    $region4: #{tpu_custom_call.1} parent=1 // pred_region
      %s14 = ssub.s32 128, 64
      %15 = vsyncadd [#allocation3], %s14
      %s16 = sshll.u32 [#allocation2], 4
      %s17 = int_to_ptr.vmem [resolvable:$true] %s16
      %22 = dma.hbm_to_vmem [thread:$0]  %s0, 64, %s17, [#allocation3], 64, 64, 4
    $region5: #{tpu_custom_call.1} parent=1 // pred_fallthru
      _
    // Predicated region
    $region6: #{tpu_custom_call.1} parent=1 // pred_check
      _
    $region7: #{tpu_custom_call.1} parent=1 // pred_check_branch
      %24 = sbr.rel (0) target = $region9
    $region8: #{tpu_custom_call.1} parent=1 // pred_region
      %s26 = ssub.s32 128, 128
      %27 = vsyncadd [#allocation6], %s26
      %s29 = sshll.u32 [#allocation5], 4
      %s30 = int_to_ptr.vmem [resolvable:$true] %s29
      %32 = dma.hbm_to_vmem [thread:$0]  %s1, 128, %s30, [#allocation6]
    $region9: #{tpu_custom_call.1} parent=1 // pred_fallthru
      _
    // Predicated region
    $region10: #{tpu_custom_call.1} parent=1 // pred_check
      _
    $region11: #{tpu_custom_call.1} parent=1 // pred_check_branch
      %34 = sbr.rel (0) target = $region13
    $region12: #{tpu_custom_call.1} parent=1 // pred_region
      _
    $region13: #{tpu_custom_call.1} parent=1 // pred_fallthru
      _
    // Predicated region
    $region14: #{tpu_custom_call.1} parent=1 // pred_check
      _
    $region15: #{tpu_custom_call.1} parent=1 // pred_check_branch
      %36 = sbr.rel (0) target = $region17
    $region16: #{tpu_custom_call.1} parent=1 // pred_region
      %37 = dma.done [#allocation3], 128
    $region17: #{tpu_custom_call.1} parent=1 // pred_fallthru
      _
    // Predicated region
    $region18: #{tpu_custom_call.1} parent=1 // pred_check
      _
    $region19: #{tpu_custom_call.1} parent=1 // pred_check_branch
      %39 = sbr.rel (0) target = $region21
    $region20: #{tpu_custom_call.1} parent=1 // pred_region
      %40 = dma.done [#allocation6], 128
    $region21: #{tpu_custom_call.1} parent=1 // pred_fallthru
      _
    %v41 = vld [vmem:[#allocation2] sm:$0xff]
    %v42 = vld [vmem:[#allocation5] sm:$0xff]
    %v43 = vld [vmem:[%s2] sm:$0x1]
    %v45 = vlaneseq
    %v46 = vshrl.u32 %v45, 7
    %v47 = vsub.s32 0, %v46
    %v48 = vrot.slane %v43, %v47
    %vm50 = vcmask 64512
    %v52 = vsel %vm50, %v41, 0
    %54 = vmatprep.subr.mxu0 0.0
    %55 = vmatpush1.msra.mxu0 %v42
    %56 = vmatprep.subr.mxu0 0.0
    %57 = vmatpush1.msra.mxu0 0.0
    %58 = vmatprep.subr.mxu0 0.0
    %59 = vmatpush1.msra.mxu0 0.0
    %60 = vmatprep.subr.mxu0 0.0
    %61 = vmatpush1.msra.mxu0 0.0
    %62 = vmatprep.subr.mxu0 0.0
    %63 = vmatpush1.msra.mxu0 0.0
    %64 = vmatprep.subr.mxu0 0.0
    %65 = vmatpush1.msra.mxu0 0.0
    %66 = vmatprep.subr.mxu0 0.0
    %67 = vmatpush1.msra.mxu0 0.0
    %68 = vmatprep.subr.mxu0 0.0
    %69 = vmatpush1.msra.mxu0 0.0
    %70 = vmatprep.subr.mxu0 0.0
    %71 = vmatpush1.msra.mxu0 0.0
    %72 = vmatprep.subr.mxu0 0.0
    %73 = vmatpush1.msra.mxu0 0.0
    %74 = vmatprep.subr.mxu0 0.0
    %75 = vmatpush1.msra.mxu0 0.0
    %76 = vmatprep.subr.mxu0 0.0
    %77 = vmatpush1.msra.mxu0 0.0
    %78 = vmatprep.subr.mxu0 0.0
    %79 = vmatpush1.msra.mxu0 0.0
    %80 = vmatprep.subr.mxu0 0.0
    %81 = vmatpush1.msra.mxu0 0.0
    %82 = vmatprep.subr.mxu0 0.0
    %83 = vmatpush1.msra.mxu0 0.0
    %84 = vmatprep.subr.mxu0 0.0
    %85 = vmatpush1.msra.mxu0 0.0
    %86 = vmatprep.subr.mxu0 0.0
    %87 = vmatpush1.msra.mxu0 0.0
    %88 = vmatprep.subr.mxu0 0.0
    %89 = vmatpush1.msra.mxu0 0.0
    %90 = vmatprep.subr.mxu0 0.0
    %91 = vmatpush1.msra.mxu0 0.0
    %92 = vmatprep.subr.mxu0 0.0
    %93 = vmatpush1.msra.mxu0 0.0
    %94 = vmatprep.subr.mxu0 0.0
    %95 = vmatpush1.msra.mxu0 0.0
    %96 = vmatprep.subr.mxu0 0.0
    %97 = vmatpush1.msra.mxu0 0.0
    %98 = vmatprep.subr.mxu0 0.0
    %99 = vmatpush1.msra.mxu0 0.0
    %100 = vmatprep.subr.mxu0 0.0
    %101 = vmatpush1.msra.mxu0 0.0
    %102 = vmatprep.subr.mxu0 0.0
    %103 = vmatpush1.msra.mxu0 0.0
    %104 = vmatprep.subr.mxu0 0.0
    %105 = vmatpush1.msra.mxu0 0.0
    %106 = vmatprep.subr.mxu0 0.0
    %107 = vmatpush1.msra.mxu0 0.0
    %108 = vmatprep.subr.mxu0 0.0
    %109 = vmatpush1.msra.mxu0 0.0
    %110 = vmatprep.subr.mxu0 0.0
    %111 = vmatpush1.msra.mxu0 0.0
    %112 = vmatprep.subr.mxu0 0.0
    %113 = vmatpush1.msra.mxu0 0.0
    %114 = vmatprep.subr.mxu0 0.0
    %115 = vmatpush1.msra.mxu0 0.0
    %116 = vmatprep.subr.mxu0 0.0
    %117 = vmatpush1.msra.mxu0 0.0
    %118 = vmatprep.mubr.f32.mxu0 0.0
    %119 = vmatmul.mubr.f32.gmra.mrb[0].mxu0 %v52
    %v120 = vpop.f32.mrb[0].mxu0
    %v121 = vadd.f32 %v48, %v120
    %v122 = vpop.f32.mrb[0].mxu0
    %123 = vdwg.mxu0
    %vm124 = vcmask 39936
    %125 = vst.msk [vmem:[#allocation7] sm:$0xff] %vm124, %v121
    // Predicated region
    $region22: #{tpu_custom_call.1} parent=1 // pred_check
      _
    $region23: #{tpu_custom_call.1} parent=1 // pred_check_branch
      %127 = sbr.rel (0) target = $region25
    $region24: #{tpu_custom_call.1} parent=1 // pred_region
      %s129 = ssub.s32 128, 64
      %130 = vsyncadd [#allocation4], %s129
      %s131 = sshll.u32 [#allocation7], 4
      %s132 = int_to_ptr.vmem [resolvable:$true] %s131
      %137 = dma.vmem_to_hbm [thread:$0]  %s132, 64, %s3, [#allocation4], 64, 64, 4
    $region25: #{tpu_custom_call.1} parent=1 // pred_fallthru
      _
    // Predicated region
    $region26: #{tpu_custom_call.1} parent=1 // pred_check
      _
    $region27: #{tpu_custom_call.1} parent=1 // pred_check_branch
      %139 = sbr.rel (0) target = $region29
    $region28: #{tpu_custom_call.1} parent=1 // pred_region
      %140 = dma.done [#allocation4], 128
    $region29: #{tpu_custom_call.1} parent=1 // pred_fallthru
      _
    %141 = vsyncpa [#allocation3], 1
    %142 = vsyncpa [#allocation6], 1
    %143 = vsyncpa [#allocation4], 1

</llo_original>
